<compile_context>
chip_gen: v7x
topology: tpu7x:2x2x1
jax: 0.10.0
libtpu: 0.0.40
codegen_flags: <defaults>
</compile_context>

<pallas_src>
import functools

import jax
import jax.numpy as jnp
from jax.experimental import pallas as pl
from jax.experimental.pallas import tpu as pltpu


# ----------------------------------------------------------------------------
# Kernel: one batch tile, both Q-branches fused along the lane axis.
# ----------------------------------------------------------------------------
def critic_kernel(x_ref,
                  wp_ref, bp_ref,
                  wh1_ref, bh1_ref,
                  wh2_ref, bh2_ref,
                  wfc_ref, bfc_ref,
                  q_ref):
    x = x_ref[...]                                                # bf16 (TB, S+A)

    # Extended preprocess: u = [s1, s2, relu(a), relu(-a)]  (TB, 2F+2A)
    u = jnp.maximum(
        jnp.dot(x, wp_ref[...], preferred_element_type=jnp.float32)
        + bp_ref[...], 0.0)

    # Head layer 1 (single row-stacked matmul; action folded via +I/-I lanes).
    h = jnp.maximum(
        jnp.dot(u.astype(jnp.bfloat16), wh1_ref[...],
                preferred_element_type=jnp.float32)
        + bh1_ref[...], 0.0)                                      # (TB, 2H)

    # Head layer 2 (block-diagonal) + ReLU.
    f = jnp.maximum(
        jnp.dot(h.astype(jnp.bfloat16), wh2_ref[...],
                preferred_element_type=jnp.float32)
        + bh2_ref[...], 0.0)                                      # (TB, 2F)

    # Fused final fc heads: block_diag(wfc1, wfc2) -> single (TB, 2) store.
    q_ref[...] = (jnp.dot(f.astype(jnp.bfloat16), wfc_ref[...],
                          preferred_element_type=jnp.float32)
                  + bfc_ref[...])


# ----------------------------------------------------------------------------
# Parameter fusion (call ONCE, outside the hot path).
# ----------------------------------------------------------------------------
def _block_diag(a, b):
    ra, ca = a.shape
    rb, cb = b.shape
    top = jnp.concatenate([a, jnp.zeros((ra, cb), a.dtype)], axis=1)
    bot = jnp.concatenate([jnp.zeros((rb, ca), b.dtype), b], axis=1)
    return jnp.concatenate([top, bot], axis=0)


def fuse_params(p, state_dim, action_dim, feat_dim, compute_dtype=jnp.bfloat16):
    """Fuse the two branches' weights; cast matmul weights to bf16 once."""
    S, A, F = state_dim, action_dim, feat_dim
    f32 = jnp.float32
    eye = jnp.eye(A, dtype=f32)

    # Extended preprocess: x = [state, action] -> u = [s1, s2, relu(a), relu(-a)].
    wp_top = jnp.concatenate([p["wp1"], p["wp2"], jnp.zeros((S, 2 * A), f32)],
                             axis=1)                               # (S, 2F+2A)
    wp_bot = jnp.concatenate([jnp.zeros((A, 2 * F), f32), eye, -eye], axis=1)
    wp = jnp.concatenate([wp_top, wp_bot], axis=0)                 # (S+A, 2F+2A)
    bp = jnp.concatenate([p["bp1"], p["bp2"], jnp.zeros((1, 2 * A), f32)],
                         axis=1)                                   # (1, 2F+2A)

    # Head layer 1: block-diag on the s-rows, +/- action rows (relu split).
    wh1_s = _block_diag(p["wh1_1"][:F], p["wh1_2"][:F])            # (2F, 2H)
    wh1_a = jnp.concatenate([p["wh1_1"][F:], p["wh1_2"][F:]], axis=1)  # (A, 2H)
    wh1 = jnp.concatenate([wh1_s, wh1_a, -wh1_a], axis=0)          # (2F+2A, 2H)
    bh1 = jnp.concatenate([p["bh1_1"], p["bh1_2"]], axis=1)        # (1, 2H)

    wh2 = _block_diag(p["wh2_1"], p["wh2_2"])                      # (2H, 2F)
    bh2 = jnp.concatenate([p["bh2_1"], p["bh2_2"]], axis=1)        # (1, 2F)
    wfc = _block_diag(p["wfc1"], p["wfc2"])                        # (2F, 2)
    bfc = jnp.concatenate([p["bfc1"], p["bfc2"]], axis=1)          # (1, 2)

    cast = lambda w: w.astype(compute_dtype)
    # Weights bf16 (MXU operands), biases stay f32 (f32 epilogue on all gens).
    return dict(wp=cast(wp), bp=bp, wh1=cast(wh1), bh1=bh1,
                wh2=cast(wh2), bh2=bh2, wfc=cast(wfc), bfc=bfc)


# ----------------------------------------------------------------------------
# Forward wrapper: batch-tiled pallas_call.
# ----------------------------------------------------------------------------
def _ceil_to(x, m):
    return ((x + m - 1) // m) * m


def _pick_batch_tile(B, cap=8192):
    if B <= 512:
        return B                       # single full-array block (always legal)
    # Aim for >= 8 grid steps (both v7x cores get >= 4 pipelined tiles),
    # 256-row aligned, capped so VMEM footprint stays small on every gen.
    tb = _ceil_to(-(-B // 8), 256)
    return min(tb, cap, B)


@functools.partial(jax.jit, static_argnames=("batch_tile",))
def critic_forward(state, action, fused, batch_tile=None):
    B, S = state.shape
    A = action.shape[1]

    # Fold torch.cat([state, action], 1) into the input stream (same bytes,
    # one DMA stream instead of two); bf16 halves the streamed HBM traffic.
    x = jnp.concatenate([state, action], axis=1).astype(fused["wp"].dtype)

    TB = batch_tile if batch_tile is not None else _pick_batch_tile(B)
    TB = min(TB, B)
    num_tiles = pl.cdiv(B, TB)
    # NOTE: no jnp.pad — a ragged last tile uses Pallas' masked partial-block
    # read/write; out-of-range rows are discarded by q[:B] below.

    weight_order = ("wp", "bp", "wh1", "bh1", "wh2", "bh2", "wfc", "bfc")
    weights = [fused[k] for k in weight_order]

    def resident_spec(w):
        # Full-array block, same block index every step -> stays VMEM-resident.
        return pl.BlockSpec(w.shape, lambda i: (0, 0))

    q = pl.pallas_call(
        critic_kernel,
        out_shape=jax.ShapeDtypeStruct((B, 2), jnp.float32),
        grid=(num_tiles,),
        in_specs=[pl.BlockSpec((TB, S + A), lambda i: (i, 0))]
                 + [resident_spec(w) for w in weights],
        out_specs=pl.BlockSpec((TB, 2), lambda i: (i, 0)),
        compiler_params=pltpu.CompilerParams(
            dimension_semantics=("parallel",)),
    )(x, *weights)

    return q[:, 0:1], q[:, 1:2]


# ----------------------------------------------------------------------------
# Parameter construction (PyTorch Linear-style init) + pure-JAX reference.
# ----------------------------------------------------------------------------
def make_params(key, state_dim, action_dim, feat_dim, hidden):
    sa_dim = feat_dim + action_dim
    ks = jax.random.split(key, 10)

    def init(k, shape, fan_in):
        bound = float(fan_in) ** -0.5
        return jax.random.uniform(k, shape, jnp.float32, -bound, bound)

    p = {
        # branch-1 trunk + fc
        "wp1": init(ks[0], (state_dim, feat_dim), state_dim),
        "bp1": init(ks[1], (1, feat_dim), state_dim),
        "wh1_1": init(ks[2], (sa_dim, hidden), sa_dim),
        "bh1_1": init(ks[3], (1, hidden), sa_dim),
        "wh2_1": init(ks[4], (hidden, feat_dim), hidden),
        "bh2_1": init(ks[5], (1, feat_dim), hidden),
        "wfc1": init(ks[6], (feat_dim, 1), feat_dim),
        "bfc1": init(ks[7], (1, 1), feat_dim),
        # fc2 is a freshly-initialized Linear (independent keys).
        "wfc2": init(ks[8], (feat_dim, 1), feat_dim),
        "bfc2": init(ks[9], (1, 1), feat_dim),
    }
    # copy.deepcopy at init: branch-2 trunk starts identical to branch 1,
    # but is an independent parameter set (may diverge during training).
    p.update({"wp2": p["wp1"], "bp2": p["bp1"],
              "wh1_2": p["wh1_1"], "bh1_2": p["bh1_1"],
              "wh2_2": p["wh2_1"], "bh2_2": p["bh2_1"]})
    return p


def critic_reference(state, action, p):
    """Pure-JAX f32 reference mirroring the PyTorch forward (twin branches)."""
    def branch(wp, bp, wh1, bh1, wh2, bh2, wfc, bfc):
        s = jnp.maximum(state @ wp + bp, 0.0)
        sa = jnp.concatenate([s, action], axis=1)
        h = jnp.maximum(sa @ wh1 + bh1, 0.0)
        f = jnp.maximum(h @ wh2 + bh2, 0.0)
        return f @ wfc + bfc
    q1 = branch(p["wp1"], p["bp1"], p["wh1_1"], p["bh1_1"],
                p["wh2_1"], p["bh2_1"], p["wfc1"], p["bfc1"])
    q2 = branch(p["wp2"], p["bp2"], p["wh1_2"], p["bh1_2"],
                p["wh2_2"], p["bh2_2"], p["wfc2"], p["bfc2"])
    return q1, q2


if __name__ == "__main__":
    B, STATE_DIM, ACTION_DIM, FEAT_DIM, HIDDEN = 8, 16, 4, 32, 32

    key = jax.random.PRNGKey(0)
    k_state, k_action, k_params = jax.random.split(key, 3)
    state = jax.random.normal(k_state, (B, STATE_DIM), jnp.float32)
    action = jax.random.normal(k_action, (B, ACTION_DIM), jnp.float32)
    params = make_params(k_params, STATE_DIM, ACTION_DIM, FEAT_DIM, HIDDEN)

    # Simulate post-training divergence of the twin critic so the test actually
    # exercises independent branch-2 trunk weights.
    nkeys = jax.random.split(jax.random.PRNGKey(1), 6)
    for i, name in enumerate(["wp2", "bp2", "wh1_2", "bh1_2", "wh2_2", "bh2_2"]):
        params[name] = params[name] + 0.01 * jax.random.normal(
            nkeys[i], params[name].shape, jnp.float32)

    # Weight fusion hoisted out of the hot path (done once).
    fused = fuse_params(params, STATE_DIM, ACTION_DIM, FEAT_DIM)

    q1, q2 = critic_forward(state, action, fused)
    jax.block_until_ready((q1, q2))

    r1, r2 = critic_reference(state, action, params)
    assert q1.shape == (B, 1) and q2.shape == (B, 1)
    # bf16 matmul operands (f32 accumulation) -> loosened tolerance vs f32 ref.
    assert jnp.allclose(q1, r1, atol=3e-2, rtol=3e-2), float(jnp.max(jnp.abs(q1 - r1)))
    assert jnp.allclose(q2, r2, atol=3e-2, rtol=3e-2), float(jnp.max(jnp.abs(q2 - r2)))
    print("KERNEL_OK")
</pallas_src>

<mosaic_0001>
module attributes {stable_mosaic.version = 11 : i64} {
  func.func @critic_kernel(%arg0: i32, %arg1: memref<8x20xbf16, #tpu.memory_space<vmem>>, %arg2: memref<20x72xbf16, #tpu.memory_space<vmem>>, %arg3: memref<1x72xf32, #tpu.memory_space<vmem>>, %arg4: memref<72x64xbf16, #tpu.memory_space<vmem>>, %arg5: memref<1x64xf32, #tpu.memory_space<vmem>>, %arg6: memref<64x64xbf16, #tpu.memory_space<vmem>>, %arg7: memref<1x64xf32, #tpu.memory_space<vmem>>, %arg8: memref<64x2xbf16, #tpu.memory_space<vmem>>, %arg9: memref<1x2xf32, #tpu.memory_space<vmem>>, %arg10: memref<8x2xf32, #tpu.memory_space<vmem>>) attributes {dimension_semantics = [#tpu.dimension_semantics<parallel>], iteration_bounds = array<i64: 1>, scalar_prefetch = 0 : i64, scratch_operands = 0 : i64, tpu.core_type = #tpu.core_type<tc>, window_params = [{transform_indices = @transform_0, window_bounds = array<i64: 8, 20>}, {pipeline_mode = #tpu.pipeline_mode<synchronous>, transform_indices = @transform_1, window_bounds = array<i64: 20, 72>}, {pipeline_mode = #tpu.pipeline_mode<synchronous>, transform_indices = @transform_2, window_bounds = array<i64: 1, 72>}, {pipeline_mode = #tpu.pipeline_mode<synchronous>, transform_indices = @transform_3, window_bounds = array<i64: 72, 64>}, {pipeline_mode = #tpu.pipeline_mode<synchronous>, transform_indices = @transform_4, window_bounds = array<i64: 1, 64>}, {pipeline_mode = #tpu.pipeline_mode<synchronous>, transform_indices = @transform_5, window_bounds = array<i64: 64, 64>}, {pipeline_mode = #tpu.pipeline_mode<synchronous>, transform_indices = @transform_6, window_bounds = array<i64: 1, 64>}, {pipeline_mode = #tpu.pipeline_mode<synchronous>, transform_indices = @transform_7, window_bounds = array<i64: 64, 2>}, {pipeline_mode = #tpu.pipeline_mode<synchronous>, transform_indices = @transform_8, window_bounds = array<i64: 1, 2>}, {transform_indices = @transform_9, window_bounds = array<i64: 8, 2>}]} {
    %c0 = arith.constant 0 : index
    %c0_0 = arith.constant 0 : index
    %0 = vector.load %arg1[%c0, %c0_0] : memref<8x20xbf16, #tpu.memory_space<vmem>>, vector<8x20xbf16>
    %c0_1 = arith.constant 0 : index
    %c0_2 = arith.constant 0 : index
    %1 = vector.load %arg2[%c0_1, %c0_2] : memref<20x72xbf16, #tpu.memory_space<vmem>>, vector<20x72xbf16>
    %cst = arith.constant dense<0.000000e+00> : vector<8x72xf32>
    %2 = tpu.matmul %0, %1, %cst {dimension_numbers = #tpu.dot_dimension_numbers<[1], [0], [0], [1], [0, 0, 1, 1], [], []>} : vector<8x20xbf16>, vector<20x72xbf16>, vector<8x72xf32> -> vector<8x72xf32>
    %c0_3 = arith.constant 0 : index
    %c0_4 = arith.constant 0 : index
    %3 = vector.load %arg3[%c0_3, %c0_4] : memref<1x72xf32, #tpu.memory_space<vmem>>, vector<1x72xf32>
    %4 = vector.broadcast %3 : vector<1x72xf32> to vector<8x72xf32>
    %5 = arith.addf %2, %4 : vector<8x72xf32>
    %cst_5 = arith.constant 0.000000e+00 : f32
    %6 = vector.broadcast %cst_5 : f32 to vector<8x72xf32>
    %7 = arith.maximumf %5, %6 : vector<8x72xf32>
    %8 = arith.truncf %7 : vector<8x72xf32> to vector<8x72xbf16>
    %c0_6 = arith.constant 0 : index
    %c0_7 = arith.constant 0 : index
    %9 = vector.load %arg4[%c0_6, %c0_7] : memref<72x64xbf16, #tpu.memory_space<vmem>>, vector<72x64xbf16>
    %cst_8 = arith.constant dense<0.000000e+00> : vector<8x64xf32>
    %10 = tpu.matmul %8, %9, %cst_8 {dimension_numbers = #tpu.dot_dimension_numbers<[1], [0], [0], [1], [0, 0, 1, 1], [], []>} : vector<8x72xbf16>, vector<72x64xbf16>, vector<8x64xf32> -> vector<8x64xf32>
    %c0_9 = arith.constant 0 : index
    %c0_10 = arith.constant 0 : index
    %11 = vector.load %arg5[%c0_9, %c0_10] : memref<1x64xf32, #tpu.memory_space<vmem>>, vector<1x64xf32>
    %12 = vector.broadcast %11 : vector<1x64xf32> to vector<8x64xf32>
    %13 = arith.addf %10, %12 : vector<8x64xf32>
    %cst_11 = arith.constant 0.000000e+00 : f32
    %14 = vector.broadcast %cst_11 : f32 to vector<8x64xf32>
    %15 = arith.maximumf %13, %14 : vector<8x64xf32>
    %16 = arith.truncf %15 : vector<8x64xf32> to vector<8x64xbf16>
    %c0_12 = arith.constant 0 : index
    %c0_13 = arith.constant 0 : index
    %17 = vector.load %arg6[%c0_12, %c0_13] : memref<64x64xbf16, #tpu.memory_space<vmem>>, vector<64x64xbf16>
    %cst_14 = arith.constant dense<0.000000e+00> : vector<8x64xf32>
    %18 = tpu.matmul %16, %17, %cst_14 {dimension_numbers = #tpu.dot_dimension_numbers<[1], [0], [0], [1], [0, 0, 1, 1], [], []>} : vector<8x64xbf16>, vector<64x64xbf16>, vector<8x64xf32> -> vector<8x64xf32>
    %c0_15 = arith.constant 0 : index
    %c0_16 = arith.constant 0 : index
    %19 = vector.load %arg7[%c0_15, %c0_16] : memref<1x64xf32, #tpu.memory_space<vmem>>, vector<1x64xf32>
    %20 = vector.broadcast %19 : vector<1x64xf32> to vector<8x64xf32>
    %21 = arith.addf %18, %20 : vector<8x64xf32>
    %cst_17 = arith.constant 0.000000e+00 : f32
    %22 = vector.broadcast %cst_17 : f32 to vector<8x64xf32>
    %23 = arith.maximumf %21, %22 : vector<8x64xf32>
    %24 = arith.truncf %23 : vector<8x64xf32> to vector<8x64xbf16>
    %c0_18 = arith.constant 0 : index
    %c0_19 = arith.constant 0 : index
    %25 = vector.load %arg8[%c0_18, %c0_19] : memref<64x2xbf16, #tpu.memory_space<vmem>>, vector<64x2xbf16>
    %cst_20 = arith.constant dense<0.000000e+00> : vector<8x2xf32>
    %26 = tpu.matmul %24, %25, %cst_20 {dimension_numbers = #tpu.dot_dimension_numbers<[1], [0], [0], [1], [0, 0, 1, 1], [], []>} : vector<8x64xbf16>, vector<64x2xbf16>, vector<8x2xf32> -> vector<8x2xf32>
    %c0_21 = arith.constant 0 : index
    %c0_22 = arith.constant 0 : index
    %27 = vector.load %arg9[%c0_21, %c0_22] : memref<1x2xf32, #tpu.memory_space<vmem>>, vector<1x2xf32>
    %28 = vector.broadcast %27 : vector<1x2xf32> to vector<8x2xf32>
    %29 = arith.addf %26, %28 : vector<8x2xf32>
    %c0_23 = arith.constant 0 : index
    %c0_24 = arith.constant 0 : index
    %30 = vector.load %arg10[%c0_23, %c0_24] : memref<8x2xf32, #tpu.memory_space<vmem>>, vector<8x2xf32>
    tpu.vector_store %arg10[%c0_23, %c0_24], %29 {strides = array<i32>} : memref<8x2xf32, #tpu.memory_space<vmem>>, vector<8x2xf32>,
    return
  }
  func.func @transform_0(%arg0: i32) -> (i32, i32) {
    %c0_i32 = arith.constant 0 : i32
    %c0_i32_0 = arith.constant 0 : i32
    return %arg0, %c0_i32 : i32, i32
  }
  func.func @transform_1(%arg0: i32) -> (i32, i32) {
    %c0_i32 = arith.constant 0 : i32
    %c0_i32_0 = arith.constant 0 : i32
    %c0_i32_1 = arith.constant 0 : i32
    return %c0_i32, %c0_i32_0 : i32, i32
  }
  func.func @transform_2(%arg0: i32) -> (i32, i32) {
    %c0_i32 = arith.constant 0 : i32
    %c0_i32_0 = arith.constant 0 : i32
    %c0_i32_1 = arith.constant 0 : i32
    return %c0_i32, %c0_i32_0 : i32, i32
  }
  func.func @transform_3(%arg0: i32) -> (i32, i32) {
    %c0_i32 = arith.constant 0 : i32
    %c0_i32_0 = arith.constant 0 : i32
    %c0_i32_1 = arith.constant 0 : i32
    return %c0_i32, %c0_i32_0 : i32, i32
  }
  func.func @transform_4(%arg0: i32) -> (i32, i32) {
    %c0_i32 = arith.constant 0 : i32
    %c0_i32_0 = arith.constant 0 : i32
    %c0_i32_1 = arith.constant 0 : i32
    return %c0_i32, %c0_i32_0 : i32, i32
  }
  func.func @transform_5(%arg0: i32) -> (i32, i32) {
    %c0_i32 = arith.constant 0 : i32
    %c0_i32_0 = arith.constant 0 : i32
    %c0_i32_1 = arith.constant 0 : i32
    return %c0_i32, %c0_i32_0 : i32, i32
  }
  func.func @transform_6(%arg0: i32) -> (i32, i32) {
    %c0_i32 = arith.constant 0 : i32
    %c0_i32_0 = arith.constant 0 : i32
    %c0_i32_1 = arith.constant 0 : i32
    return %c0_i32, %c0_i32_0 : i32, i32
  }
  func.func @transform_7(%arg0: i32) -> (i32, i32) {
    %c0_i32 = arith.constant 0 : i32
    %c0_i32_0 = arith.constant 0 : i32
    %c0_i32_1 = arith.constant 0 : i32
    return %c0_i32, %c0_i32_0 : i32, i32
  }
  func.func @transform_8(%arg0: i32) -> (i32, i32) {
    %c0_i32 = arith.constant 0 : i32
    %c0_i32_0 = arith.constant 0 : i32
    %c0_i32_1 = arith.constant 0 : i32
    return %c0_i32, %c0_i32_0 : i32, i32
  }
  func.func @transform_9(%arg0: i32) -> (i32, i32) {
    %c0_i32 = arith.constant 0 : i32
    %c0_i32_0 = arith.constant 0 : i32
    return %arg0, %c0_i32 : i32, i32
  }
}

</mosaic_0001>

<llo_original>
// kernel: critic_forward.1
$region0: #{critic_forward.1}
  #allocation0 [shape = 'u32[]', space=smem, size = 0x4, offset = 0x4, fixed_abs, tag = 'smem constant byte address 0x4 - core index']
  #allocation1 [shape = 'u32[144,128]{1,0:T(1,128)}', space=vmem, size = 0x12000, scoped, tag = 'internal scratch']
  %s0 = inlined_call_operand.vmem [shape: bf16[8,20], index: 0, kind: input, shape index: {}]
  %s1 = inlined_call_operand.vmem [shape: bf16[20,72], index: 1, kind: input, shape index: {}]
  %s2 = inlined_call_operand.vmem [shape: f32[1,72], index: 2, kind: input, shape index: {}]
  %s3 = inlined_call_operand.vmem [shape: bf16[72,64], index: 3, kind: input, shape index: {}]
  %s4 = inlined_call_operand.vmem [shape: f32[1,64], index: 4, kind: input, shape index: {}]
  %s5 = inlined_call_operand.vmem [shape: bf16[64,64], index: 5, kind: input, shape index: {}]
  %s6 = inlined_call_operand.vmem [shape: f32[1,64], index: 6, kind: input, shape index: {}]
  %s7 = inlined_call_operand.vmem [shape: bf16[64,2], index: 7, kind: input, shape index: {}]
  %s8 = inlined_call_operand.vmem [shape: f32[1,2], index: 8, kind: input, shape index: {}]
  %s9 = inlined_call_operand.vmem [shape: f32[8,2], index: 9, kind: output, shape index: {}]
  %s10 = sld [smem:[#allocation0]]
  $region46: #{critic_forward.1} parent=0
    _
  %s12 = ssub.s32 1, %s10
  %s13 = scalar_select 0, %s12, %s10
  // Predicated region
  $region2: #{critic_forward.1} parent=0 // pred_check
    _
  $region3: #{critic_forward.1} parent=0 // pred_check_branch
    %15 = sbr.rel (0) target = $region5
  $region4: #{critic_forward.1} parent=0 // pred_region
    _
  $region5: #{critic_forward.1} parent=0 // pred_fallthru
    _
  // Predicated region
  $region6: #{critic_forward.1} parent=0 // pred_check
    _
  $region7: #{critic_forward.1} parent=0 // pred_check_branch
    %17 = sbr.rel (0) target = $region9
  $region8: #{critic_forward.1} parent=0 // pred_region
    _
  $region9: #{critic_forward.1} parent=0 // pred_fallthru
    _
  // Predicated region
  $region10: #{critic_forward.1} parent=0 // pred_check
    _
  $region11: #{critic_forward.1} parent=0 // pred_check_branch
    %19 = sbr.rel (0) target = $region13
  $region12: #{critic_forward.1} parent=0 // pred_region
    _
  $region13: #{critic_forward.1} parent=0 // pred_fallthru
    _
  // Predicated region
  $region14: #{critic_forward.1} parent=0 // pred_check
    _
  $region15: #{critic_forward.1} parent=0 // pred_check_branch
    %21 = sbr.rel (0) target = $region17
  $region16: #{critic_forward.1} parent=0 // pred_region
    _
  $region17: #{critic_forward.1} parent=0 // pred_fallthru
    _
  // Predicated region
  $region18: #{critic_forward.1} parent=0 // pred_check
    _
  $region19: #{critic_forward.1} parent=0 // pred_check_branch
    %23 = sbr.rel (0) target = $region21
  $region20: #{critic_forward.1} parent=0 // pred_region
    _
  $region21: #{critic_forward.1} parent=0 // pred_fallthru
    _
  // Predicated region
  $region22: #{critic_forward.1} parent=0 // pred_check
    _
  $region23: #{critic_forward.1} parent=0 // pred_check_branch
    %25 = sbr.rel (0) target = $region25
  $region24: #{critic_forward.1} parent=0 // pred_region
    _
  $region25: #{critic_forward.1} parent=0 // pred_fallthru
    _
  // Predicated region
  $region26: #{critic_forward.1} parent=0 // pred_check
    _
  $region27: #{critic_forward.1} parent=0 // pred_check_branch
    %27 = sbr.rel (0) target = $region29
  $region28: #{critic_forward.1} parent=0 // pred_region
    _
  $region29: #{critic_forward.1} parent=0 // pred_fallthru
    _
  // Predicated region
  $region30: #{critic_forward.1} parent=0 // pred_check
    _
  $region31: #{critic_forward.1} parent=0 // pred_check_branch
    %29 = sbr.rel (0) target = $region33
  $region32: #{critic_forward.1} parent=0 // pred_region
    _
  $region33: #{critic_forward.1} parent=0 // pred_fallthru
    _
  // Predicated region
  $region34: #{critic_forward.1} parent=0 // pred_check
    _
  $region35: #{critic_forward.1} parent=0 // pred_check_branch
    %31 = sbr.rel (0) target = $region37
  $region36: #{critic_forward.1} parent=0 // pred_region
    _
  $region37: #{critic_forward.1} parent=0 // pred_fallthru
    _
  %v33 = vld [vmem:[%s0] sm:$0xf]
  %v34 = vld [vmem:[%s1] sm:$0xf]
  %v35 = vld [vmem:[%s1 + $0x4] sm:$0xf]
  %v36 = vld [vmem:[%s1 + $0x8] sm:$0x3]
  %v37 = vld [vmem:[%s2] sm:$0x1]
  %v39 = vlaneseq
  %v40 = vshrl.u32 %v39, 7
  %v41 = vsub.s32 0, %v40
  %v42 = vrot.slane %v37, %v41
  %v47 = vunpack.c.l.b16 %v34
  %v48 = vunpack.c.l.b16 %v35
  %v49 = vunpack.c.l.b16 %v36
  %v50 = vpack.c.b16 %v48, %v47
  %v51 = vpack.c.b16 %v49, %v49
  %vm53 = vcmask 162816
  %v55 = vsel %vm53, %v33, 0
  %vm57 = vcmask 1041408
  %v59 = vsel %vm57, %v51, 0
  %61 = vmatprep.subr.bf16.mxu0 0
  %62 = vmatpush1.bf16.msra.mxu0 %v50
  %63 = vmatprep.subr.bf16.mxu0 0
  %64 = vmatpush1.bf16.msra.mxu0 %v59
  %65 = vmatprep.subr.bf16.mxu0 0
  %66 = vmatpush1.bf16.msra.mxu0 0
  %67 = vmatprep.subr.bf16.mxu0 0
  %68 = vmatpush1.bf16.msra.mxu0 0
  %69 = vmatprep.subr.bf16.mxu0 0
  %70 = vmatpush1.bf16.msra.mxu0 0
  %71 = vmatprep.subr.bf16.mxu0 0
  %72 = vmatpush1.bf16.msra.mxu0 0
  %73 = vmatprep.subr.bf16.mxu0 0
  %74 = vmatpush1.bf16.msra.mxu0 0
  %75 = vmatprep.subr.bf16.mxu0 0
  %76 = vmatpush1.bf16.msra.mxu0 0
  %77 = vmatprep.subr.bf16.mxu0 0
  %78 = vmatpush1.bf16.msra.mxu0 0
  %79 = vmatprep.subr.bf16.mxu0 0
  %80 = vmatpush1.bf16.msra.mxu0 0
  %81 = vmatprep.subr.bf16.mxu0 0
  %82 = vmatpush1.bf16.msra.mxu0 0
  %83 = vmatprep.subr.bf16.mxu0 0
  %84 = vmatpush1.bf16.msra.mxu0 0
  %85 = vmatprep.subr.bf16.mxu0 0
  %86 = vmatpush1.bf16.msra.mxu0 0
  %87 = vmatprep.subr.bf16.mxu0 0
  %88 = vmatpush1.bf16.msra.mxu0 0
  %89 = vmatprep.subr.bf16.mxu0 0
  %90 = vmatpush1.bf16.msra.mxu0 0
  %91 = vmatprep.subr.bf16.mxu0 0
  %92 = vmatpush1.bf16.msra.mxu0 0
  %93 = vmatprep.mubr.bf16.mxu0 0
  %94 = vmatmul.mubr.bf16.gmra.mrb[0].mxu0 %v55
  %v95 = vpop.f32.mrb[0].mxu0
  %v96 = vadd.f32 %v42, %v95
  %v97 = vpop.f32.mrb[0].mxu0
  %v98 = vpop.f32.mrb[0].mxu0
  %v99 = vpop.f32.mrb[0].mxu0
  %100 = vdwg.mxu0
  %v101 = vmax.f32 %v96, 0.0
  %v102 = vpack.c.bf16 %v101, %v101
  %v103 = vld [vmem:[%s3] sm:$0xf]
  %v104 = vld [vmem:[%s3 + $0x4] sm:$0xf]
  %v105 = vld [vmem:[%s3 + $0x8] sm:$0xf]
  %v106 = vld [vmem:[%s3 + $0xc] sm:$0xf]
  %v107 = vld [vmem:[%s3 + $0x10] sm:$0xf]
  %v108 = vld [vmem:[%s3 + $0x14] sm:$0xf]
  %v109 = vld [vmem:[%s3 + $0x18] sm:$0xf]
  %v110 = vld [vmem:[%s3 + $0x1c] sm:$0xf]
  %v111 = vld [vmem:[%s3 + $0x20] sm:$0xf]
  %v112 = vld [vmem:[%s4] sm:$0x1]
  %v114 = vlaneseq
  %v115 = vshrl.u32 %v114, 7
  %v116 = vsub.s32 0, %v115
  %v117 = vrot.slane %v112, %v116
  %v128 = vunpack.c.l.b16 %v103
  %v129 = vunpack.c.l.b16 %v104
  %v130 = vunpack.c.l.b16 %v105
  %v131 = vunpack.c.l.b16 %v106
  %v132 = vunpack.c.l.b16 %v107
  %v133 = vunpack.c.l.b16 %v108
  %v134 = vunpack.c.l.b16 %v109
  %v135 = vunpack.c.l.b16 %v110
  %v136 = vunpack.c.l.b16 %v111
  %v137 = vpack.c.b16 %v129, %v128
  %v138 = vpack.c.b16 %v131, %v130
  %v139 = vpack.c.b16 %v133, %v132
  %v140 = vpack.c.b16 %v135, %v134
  %v141 = vpack.c.b16 %v136, %v136
  %vm146 = vcmask 588800
  %v148 = vsel %vm146, %v102, 0
  %vm150 = vcmask 1043456
  %v152 = vsel %vm150, %v141, 0
  %154 = vmatprep.subr.bf16.mxu0 0
  %155 = vmatpush1.bf16.msra.mxu0 %v137
  %156 = vmatprep.subr.bf16.mxu0 0
  %157 = vmatpush1.bf16.msra.mxu0 %v138
  %158 = vmatprep.subr.bf16.mxu0 0
  %159 = vmatpush1.bf16.msra.mxu0 %v139
  %160 = vmatprep.subr.bf16.mxu0 0
  %161 = vmatpush1.bf16.msra.mxu0 %v140
  %162 = vmatprep.subr.bf16.mxu0 0
  %163 = vmatpush1.bf16.msra.mxu0 %v152
  %164 = vmatprep.subr.bf16.mxu0 0
  %165 = vmatpush1.bf16.msra.mxu0 0
  %166 = vmatprep.subr.bf16.mxu0 0
  %167 = vmatpush1.bf16.msra.mxu0 0
  %168 = vmatprep.subr.bf16.mxu0 0
  %169 = vmatpush1.bf16.msra.mxu0 0
  %170 = vmatprep.subr.bf16.mxu0 0
  %171 = vmatpush1.bf16.msra.mxu0 0
  %172 = vmatprep.subr.bf16.mxu0 0
  %173 = vmatpush1.bf16.msra.mxu0 0
  %174 = vmatprep.subr.bf16.mxu0 0
  %175 = vmatpush1.bf16.msra.mxu0 0
  %176 = vmatprep.subr.bf16.mxu0 0
  %177 = vmatpush1.bf16.msra.mxu0 0
  %178 = vmatprep.subr.bf16.mxu0 0
  %179 = vmatpush1.bf16.msra.mxu0 0
  %180 = vmatprep.subr.bf16.mxu0 0
  %181 = vmatpush1.bf16.msra.mxu0 0
  %182 = vmatprep.subr.bf16.mxu0 0
  %183 = vmatpush1.bf16.msra.mxu0 0
  %184 = vmatprep.subr.bf16.mxu0 0
  %185 = vmatpush1.bf16.msra.mxu0 0
  %186 = vmatprep.mubr.bf16.mxu0 0
  %187 = vmatmul.mubr.bf16.gmra.mrb[0].mxu0 %v148
  %v188 = vpop.f32.mrb[0].mxu0
  %v189 = vadd.f32 %v117, %v188
  %v190 = vpop.f32.mrb[0].mxu0
  %v191 = vpop.f32.mrb[0].mxu0
  %v192 = vpop.f32.mrb[0].mxu0
  %193 = vdwg.mxu0
  %v194 = vmax.f32 %v189, 0.0
  %v195 = vpack.c.bf16 %v194, %v194
  %v196 = vld [vmem:[%s5] sm:$0xf]
  %v197 = vld [vmem:[%s5 + $0x4] sm:$0xf]
  %v198 = vld [vmem:[%s5 + $0x8] sm:$0xf]
  %v199 = vld [vmem:[%s5 + $0xc] sm:$0xf]
  %v200 = vld [vmem:[%s5 + $0x10] sm:$0xf]
  %v201 = vld [vmem:[%s5 + $0x14] sm:$0xf]
  %v202 = vld [vmem:[%s5 + $0x18] sm:$0xf]
  %v203 = vld [vmem:[%s5 + $0x1c] sm:$0xf]
  %v204 = vld [vmem:[%s6] sm:$0x1]
  %v206 = vlaneseq
  %v207 = vshrl.u32 %v206, 7
  %v208 = vsub.s32 0, %v207
  %v209 = vrot.slane %v204, %v208
  %v219 = vunpack.c.l.b16 %v196
  %v220 = vunpack.c.l.b16 %v197
  %v221 = vunpack.c.l.b16 %v198
  %v222 = vunpack.c.l.b16 %v199
  %v223 = vunpack.c.l.b16 %v200
  %v224 = vunpack.c.l.b16 %v201
  %v225 = vunpack.c.l.b16 %v202
  %v226 = vunpack.c.l.b16 %v203
  %v227 = vpack.c.b16 %v220, %v219
  %v228 = vpack.c.b16 %v222, %v221
  %v229 = vpack.c.b16 %v224, %v223
  %v230 = vpack.c.b16 %v226, %v225
  %vm235 = vcmask 523264
  %v237 = vsel %vm235, %v195, 0
  %239 = vmatprep.subr.bf16.mxu0 0
  %240 = vmatpush1.bf16.msra.mxu0 %v227
  %241 = vmatprep.subr.bf16.mxu0 0
  %242 = vmatpush1.bf16.msra.mxu0 %v228
  %243 = vmatprep.subr.bf16.mxu0 0
  %244 = vmatpush1.bf16.msra.mxu0 %v229
  %245 = vmatprep.subr.bf16.mxu0 0
  %246 = vmatpush1.bf16.msra.mxu0 %v230
  %247 = vmatprep.subr.bf16.mxu0 0
  %248 = vmatpush1.bf16.msra.mxu0 0
  %249 = vmatprep.subr.bf16.mxu0 0
  %250 = vmatpush1.bf16.msra.mxu0 0
  %251 = vmatprep.subr.bf16.mxu0 0
  %252 = vmatpush1.bf16.msra.mxu0 0
  %253 = vmatprep.subr.bf16.mxu0 0
  %254 = vmatpush1.bf16.msra.mxu0 0
  %255 = vmatprep.subr.bf16.mxu0 0
  %256 = vmatpush1.bf16.msra.mxu0 0
  %257 = vmatprep.subr.bf16.mxu0 0
  %258 = vmatpush1.bf16.msra.mxu0 0
  %259 = vmatprep.subr.bf16.mxu0 0
  %260 = vmatpush1.bf16.msra.mxu0 0
  %261 = vmatprep.subr.bf16.mxu0 0
  %262 = vmatpush1.bf16.msra.mxu0 0
  %263 = vmatprep.subr.bf16.mxu0 0
  %264 = vmatpush1.bf16.msra.mxu0 0
  %265 = vmatprep.subr.bf16.mxu0 0
  %266 = vmatpush1.bf16.msra.mxu0 0
  %267 = vmatprep.subr.bf16.mxu0 0
  %268 = vmatpush1.bf16.msra.mxu0 0
  %269 = vmatprep.subr.bf16.mxu0 0
  %270 = vmatpush1.bf16.msra.mxu0 0
  %271 = vmatprep.mubr.bf16.mxu0 0
  %272 = vmatmul.mubr.bf16.gmra.mrb[0].mxu0 %v237
  %v273 = vpop.f32.mrb[0].mxu0
  %v274 = vadd.f32 %v209, %v273
  %v275 = vpop.f32.mrb[0].mxu0
  %v276 = vpop.f32.mrb[0].mxu0
  %v277 = vpop.f32.mrb[0].mxu0
  %278 = vdwg.mxu0
  %v279 = vmax.f32 %v274, 0.0
  %v280 = vpack.c.bf16 %v279, %v279
  %v281 = vld [vmem:[%s7] sm:$0xf]
  %v282 = vld [vmem:[%s7 + $0x4] sm:$0xf]
  %v283 = vld [vmem:[%s7 + $0x8] sm:$0xf]
  %v284 = vld [vmem:[%s7 + $0xc] sm:$0xf]
  %v285 = vld [vmem:[%s7 + $0x10] sm:$0xf]
  %v286 = vld [vmem:[%s7 + $0x14] sm:$0xf]
  %v287 = vld [vmem:[%s7 + $0x18] sm:$0xf]
  %v288 = vld [vmem:[%s7 + $0x1c] sm:$0xf]
  %v289 = vld [vmem:[%s8] sm:$0x1]
  %v291 = vlaneseq
  %v292 = vshrl.u32 %v291, 7
  %v293 = vsub.s32 0, %v292
  %v294 = vrot.slane %v289, %v293
  %v304 = vunpack.c.l.b16 %v281
  %v305 = vunpack.c.l.b16 %v282
  %v306 = vunpack.c.l.b16 %v283
  %v307 = vunpack.c.l.b16 %v284
  %v308 = vunpack.c.l.b16 %v285
  %v309 = vunpack.c.l.b16 %v286
  %v310 = vunpack.c.l.b16 %v287
  %v311 = vunpack.c.l.b16 %v288
  %v312 = vpack.c.b16 %v305, %v304
  %v313 = vpack.c.b16 %v307, %v306
  %v314 = vpack.c.b16 %v309, %v308
  %v315 = vpack.c.b16 %v311, %v310
  %v321 = vsel %vm235, %v280, 0
  %323 = vmatprep.subr.bf16.mxu0 0
  %324 = vmatpush1.bf16.msra.mxu0 %v312
  %325 = vmatprep.subr.bf16.mxu0 0
  %326 = vmatpush1.bf16.msra.mxu0 %v313
  %327 = vmatprep.subr.bf16.mxu0 0
  %328 = vmatpush1.bf16.msra.mxu0 %v314
  %329 = vmatprep.subr.bf16.mxu0 0
  %330 = vmatpush1.bf16.msra.mxu0 %v315
  %331 = vmatprep.subr.bf16.mxu0 0
  %332 = vmatpush1.bf16.msra.mxu0 0
  %333 = vmatprep.subr.bf16.mxu0 0
  %334 = vmatpush1.bf16.msra.mxu0 0
  %335 = vmatprep.subr.bf16.mxu0 0
  %336 = vmatpush1.bf16.msra.mxu0 0
  %337 = vmatprep.subr.bf16.mxu0 0
  %338 = vmatpush1.bf16.msra.mxu0 0
  %339 = vmatprep.subr.bf16.mxu0 0
  %340 = vmatpush1.bf16.msra.mxu0 0
  %341 = vmatprep.subr.bf16.mxu0 0
  %342 = vmatpush1.bf16.msra.mxu0 0
  %343 = vmatprep.subr.bf16.mxu0 0
  %344 = vmatpush1.bf16.msra.mxu0 0
  %345 = vmatprep.subr.bf16.mxu0 0
  %346 = vmatpush1.bf16.msra.mxu0 0
  %347 = vmatprep.subr.bf16.mxu0 0
  %348 = vmatpush1.bf16.msra.mxu0 0
  %349 = vmatprep.subr.bf16.mxu0 0
  %350 = vmatpush1.bf16.msra.mxu0 0
  %351 = vmatprep.subr.bf16.mxu0 0
  %352 = vmatpush1.bf16.msra.mxu0 0
  %353 = vmatprep.subr.bf16.mxu0 0
  %354 = vmatpush1.bf16.msra.mxu0 0
  %355 = vmatprep.mubr.bf16.mxu0 0
  %356 = vmatmul.mubr.bf16.gmra.mrb[0].mxu0 %v321
  %v357 = vpop.f32.mrb[0].mxu0
  %v358 = vadd.f32 %v294, %v357
  %v359 = vpop.f32.mrb[0].mxu0
  %v360 = vpop.f32.mrb[0].mxu0
  %v361 = vpop.f32.mrb[0].mxu0
  %362 = vdwg.mxu0
  %vm363 = vcmask 15360
  %364 = vst.msk [vmem:[%s9] sm:$0xff] %vm363, %v358
  // Predicated region
  $region38: #{critic_forward.1} parent=0 // pred_check
    _
  $region39: #{critic_forward.1} parent=0 // pred_check_branch
    %366 = sbr.rel (0) target = $region41
  $region40: #{critic_forward.1} parent=0 // pred_region
    _
  $region41: #{critic_forward.1} parent=0 // pred_fallthru
    _
  // Predicated region
  $region42: #{critic_forward.1} parent=0 // pred_check
    _
  $region43: #{critic_forward.1} parent=0 // pred_check_branch
    %368 = sbr.rel (0) target = $region45
  $region44: #{critic_forward.1} parent=0 // pred_region
    _
  $region45: #{critic_forward.1} parent=0 // pred_fallthru
    _

</llo_original>
